<compile_context>
chip_gen: v6e
topology: v6e:2x2x1
jax: 0.10.0
libtpu: 0.0.40
codegen_flags: <defaults>
</compile_context>

<pallas_src>
import math
import re

import jax
import jax.numpy as jnp
from jax.experimental import pallas as pl
from jax.experimental.pallas import tpu as pltpu


# ----------------------------------------------------------------------------
# Generation detection & per-generation tuning
# ----------------------------------------------------------------------------
def _tpu_generation():
    try:
        kind = str(jax.devices()[0].device_kind)
    except Exception:
        return 6
    mt = re.search(r"(\d+)", kind)
    return int(mt.group(1)) if mt else 6


def _gen_config():
    gen = _tpu_generation()
    if gen >= 7:
        # v7x: 3.2 TB/s HBM, 64 MiB VMEM (32 MiB scoped default), 2 TensorCores.
        # 3 x 8 MiB W2 buffers stay under the scoped default; keep >=4 grid steps.
        return dict(gen=gen, tile_bytes=8 << 20, w2_buffers=3, vmem_limit=None,
                    min_grid_steps=4, rope_block_bytes=8 << 20)
    if gen == 6:
        # v6e: ~1.4 TB/s HBM; 8 MiB tiles halve grid-step overhead; set vmem limit explicitly.
        return dict(gen=gen, tile_bytes=8 << 20, w2_buffers=2, vmem_limit=28 << 20,
                    min_grid_steps=1, rope_block_bytes=8 << 20)
    # v5e and older / unknown: 16 MiB scoped default -> keep 4 MiB tiles (x2 buffers).
    return dict(gen=gen, tile_bytes=4 << 20, w2_buffers=2, vmem_limit=None,
                min_grid_steps=1, rope_block_bytes=2 << 20)


def _compiler_params(cfg):
    kwargs = dict(dimension_semantics=("parallel",))
    if cfg["vmem_limit"] is not None:
        kwargs["vmem_limit_bytes"] = cfg["vmem_limit"]
    return pltpu.CompilerParams(**kwargs)


def _maybe_buffered_spec(block_shape, index_map, buffers):
    """BlockSpec with optional >2-deep pipelining (v7x: keep the DMA engine saturated)."""
    if buffers and buffers > 2:
        try:
            return pl.BlockSpec(block_shape, index_map, pipeline_mode=pl.Buffered(buffers))
        except (TypeError, AttributeError):
            pass  # older API without pipeline_mode -> default double buffering
    return pl.BlockSpec(block_shape, index_map)


# ----------------------------------------------------------------------------
# Tile-size helpers (cdiv / padding safe)
# ----------------------------------------------------------------------------
def _pick_lane_span(n, tile_bytes, row_bytes, max_lanes=4096):
    """Lane-tile width: the full dim if it fits, else the largest multiple of 128 within
    the byte budget / lane cap.  Used with grid = cdiv(n, span); Pallas masks the tail."""
    cap = max(128, min(max_lanes, tile_bytes // max(1, row_bytes)))
    cap -= cap % 128
    cap = max(cap, 128)
    return n if n <= cap else cap


def _pick_leading_tile(n, cap):
    """Largest divisor of n that is <= cap (leading, non-lane dim)."""
    cap = max(1, min(n, cap))
    for g in range(cap, 0, -1):
        if n % g == 0:
            return g
    return 1


def _pick_fused_groups(num_layers, group_cols, inter, itemsize, cfg):
    """m layer-groups (2*NH*D columns each) per W2 tile: largest m | L within the byte
    budget, preferring >= min_grid_steps grid steps (v7x megacore).  None if even one
    group blows the budget -> caller uses the unfused fallback."""
    budget = cfg["tile_bytes"]
    fitting = [m for m in range(1, num_layers + 1)
               if num_layers % m == 0 and m * group_cols * inter * itemsize <= budget]
    if not fitting:
        return None
    pref = [m for m in fitting if (num_layers // m) >= cfg["min_grid_steps"]]
    return max(pref) if pref else min(fitting)


# ----------------------------------------------------------------------------
# Kernel 1: h = tanh(params @ W1 + b1)   (single grid step for realistic sizes)
# ----------------------------------------------------------------------------
def _gist_hidden_kernel(p_ref, w1_ref, b1_ref, h_ref):
    acc = jnp.dot(p_ref[...], w1_ref[...], preferred_element_type=jnp.float32)
    acc = acc + b1_ref[...].astype(jnp.float32)
    h_ref[...] = jnp.tanh(acc).astype(h_ref.dtype)


def gist_hidden(params, w1, b1, cfg):
    T, H = params.shape
    I = w1.shape[1]
    itemsize = jnp.dtype(params.dtype).itemsize
    ti = _pick_lane_span(I, cfg["tile_bytes"], H * itemsize)
    grid = (pl.cdiv(I, ti),)
    return pl.pallas_call(
        _gist_hidden_kernel,
        out_shape=jax.ShapeDtypeStruct((T, I), params.dtype),
        grid=grid,
        in_specs=[
            pl.BlockSpec((T, H), lambda j: (0, 0)),      # params resident
            pl.BlockSpec((H, ti), lambda j: (0, j)),
            pl.BlockSpec((1, ti), lambda j: (0, j)),
        ],
        out_specs=pl.BlockSpec((T, ti), lambda j: (0, j)),
        compiler_params=_compiler_params(cfg),
    )(params, w1, b1.reshape(1, -1))


# ----------------------------------------------------------------------------
# Kernel 2 (hot path): out = h @ W2 + b2 with RoPE fused into the epilogue.
#   Columns are laid out [layer, kv, head, d] (d fastest).  The resident (T, tn) f32
#   tables hold cos / sign-folded sin for key columns and (1, 0) for value columns, so
#   one multiply-add applies RoPE to keys and passes values through unchanged.
# ----------------------------------------------------------------------------
def _make_gist_out_rope_kernel(head_dim):
    half = head_dim // 2

    def kernel(h_ref, w2_ref, b2_ref, cos_ref, sin_ref, o_ref):
        acc = jnp.dot(h_ref[...], w2_ref[...], preferred_element_type=jnp.float32)
        acc = acc + b2_ref[...].astype(jnp.float32)
        t, tn = acc.shape
        a3 = acc.reshape(t, tn // head_dim, head_dim)          # one (layer,kv,head) chunk per row
        rolled = pltpu.roll(a3, shift=half, axis=2).reshape(t, tn)   # rotate_half (XLU slot)
        out = acc * cos_ref[...] + rolled * sin_ref[...]       # f32 RoPE / pass-through
        o_ref[...] = out.astype(o_ref.dtype)

    return kernel


def _build_fused_rope_tables(cos, sin, num_heads, head_dim, m):
    """(T, m*2*NH*D) f32 tables, periodic per layer-group; resident in VMEM."""
    T = cos.shape[0]
    D = head_dim
    sign = jnp.concatenate([-jnp.ones((D // 2,), jnp.float32),
                            jnp.ones((D - D // 2,), jnp.float32)])
    cos_k = jnp.tile(cos.astype(jnp.float32), (1, num_heads))              # key cols
    sin_k = jnp.tile(sin.astype(jnp.float32) * sign[None, :], (1, num_heads))
    cos_g = jnp.concatenate([cos_k, jnp.ones((T, num_heads * D), jnp.float32)], axis=1)
    sin_g = jnp.concatenate([sin_k, jnp.zeros((T, num_heads * D), jnp.float32)], axis=1)
    return jnp.tile(cos_g, (1, m)), jnp.tile(sin_g, (1, m))


def gist_out_rope(h, w2, b2, cos_tab, sin_tab, head_dim, cfg):
    T, I = h.shape
    N = w2.shape[1]
    tn = cos_tab.shape[1]
    assert N % tn == 0
    grid = (N // tn,)
    return pl.pallas_call(
        _make_gist_out_rope_kernel(head_dim),
        out_shape=jax.ShapeDtypeStruct((T, N), h.dtype),
        grid=grid,
        in_specs=[
            pl.BlockSpec((T, I), lambda j: (0, 0)),                          # h resident
            _maybe_buffered_spec((I, tn), lambda j: (0, j), cfg["w2_buffers"]),  # stream W2
            pl.BlockSpec((1, tn), lambda j: (0, j)),
            pl.BlockSpec((T, tn), lambda j: (0, 0)),                         # cos table (f32)
            pl.BlockSpec((T, tn), lambda j: (0, 0)),                         # signed sin (f32)
        ],
        out_specs=pl.BlockSpec((T, tn), lambda j: (0, j)),
        compiler_params=_compiler_params(cfg),
    )(h, w2, b2.reshape(1, -1), cos_tab, sin_tab)


# ----------------------------------------------------------------------------
# Fallback path (head_dim not lane-aligned or one column-group exceeds the tile budget):
# plain W2 streaming + standalone RoPE kernel.
# ----------------------------------------------------------------------------
def _gist_out_kernel(h_ref, w2_ref, b2_ref, o_ref):
    acc = jnp.dot(h_ref[...], w2_ref[...], preferred_element_type=jnp.float32)
    o_ref[...] = (acc + b2_ref[...].astype(jnp.float32)).astype(o_ref.dtype)


def gist_out(h, w2, b2, cfg):
    T, I = h.shape
    N = w2.shape[1]
    itemsize = jnp.dtype(h.dtype).itemsize
    tn = _pick_lane_span(N, cfg["tile_bytes"], I * itemsize)
    grid = (pl.cdiv(N, tn),)
    return pl.pallas_call(
        _gist_out_kernel,
        out_shape=jax.ShapeDtypeStruct((T, N), h.dtype),
        grid=grid,
        in_specs=[
            pl.BlockSpec((T, I), lambda j: (0, 0)),
            _maybe_buffered_spec((I, tn), lambda j: (0, j), cfg["w2_buffers"]),
            pl.BlockSpec((1, tn), lambda j: (0, j)),
        ],
        out_specs=pl.BlockSpec((T, tn), lambda j: (0, j)),
        compiler_params=_compiler_params(cfg),
    )(h, w2, b2.reshape(1, -1))


def _rope_kernel(k_ref, cos_ref, sin_ref, o_ref):
    # f32 math: parity with the torch f32 cos/sin path and safe on v5e (no bf16 VPU);
    # the kernel is HBM-bound so the extra VALU work hides under the DMA.
    k = k_ref[...].astype(jnp.float32)               # (G, T, D)
    half = k.shape[-1] // 2
    rolled = pltpu.roll(k, shift=half, axis=2)       # rotate_half (sign folded into sin)
    out = k * cos_ref[...][None] + rolled * sin_ref[...][None]
    o_ref[...] = out.astype(o_ref.dtype)


def apply_rope(keys, cos, sin, cfg):
    # keys: [L, NH, T, D]; cos/sin: [T, D] f32
    L, NH, T, D = keys.shape
    dt = keys.dtype
    k2 = keys.reshape(L * NH, T, D)
    sign = jnp.concatenate([-jnp.ones((D // 2,), jnp.float32),
                            jnp.ones((D - D // 2,), jnp.float32)])
    cos_t = cos.astype(jnp.float32)
    sin_t = sin.astype(jnp.float32) * sign[None, :]
    itemsize = jnp.dtype(dt).itemsize
    g = _pick_leading_tile(L * NH, max(1, cfg["rope_block_bytes"] // max(1, T * D * itemsize)))
    grid = ((L * NH) // g,)
    out = pl.pallas_call(
        _rope_kernel,
        out_shape=jax.ShapeDtypeStruct((L * NH, T, D), dt),
        grid=grid,
        in_specs=[
            pl.BlockSpec((g, T, D), lambda i: (i, 0, 0)),
            pl.BlockSpec((T, D), lambda i: (0, 0)),
            pl.BlockSpec((T, D), lambda i: (0, 0)),
        ],
        out_specs=pl.BlockSpec((g, T, D), lambda i: (i, 0, 0)),
        compiler_params=_compiler_params(cfg),
    )(k2, cos_t, sin_t)
    return out.reshape(L, NH, T, D)


# ----------------------------------------------------------------------------
# gist MLP + view/permute + RoPE-on-keys pipeline
# ----------------------------------------------------------------------------
def gist_prefix_kv(params, w1, b1, w2, b2, cos, sin, num_layers, num_heads, head_dim):
    """Returns keys [L, NH, T, D] (RoPE applied) and values [L, NH, T, D]."""
    cfg = _gen_config()
    T = params.shape[0]
    L, NH, D = num_layers, num_heads, head_dim
    I, N = w2.shape
    G = 2 * NH * D
    itemsize = jnp.dtype(params.dtype).itemsize

    h = gist_hidden(params, w1, b1, cfg)

    m = None
    if D % 128 == 0 and D % 2 == 0 and N == L * G:
        m = _pick_fused_groups(L, G, I, itemsize, cfg)

    if m is not None:
        # RoPE fused into the W2-streaming epilogue: one HBM pass over the MLP output.
        cos_tab, sin_tab = _build_fused_rope_tables(cos, sin, NH, D, m)
        out = gist_out_rope(h, w2, b2, cos_tab, sin_tab, D, cfg)              # [T, N]
        p = out.reshape(T, L, 2, NH, D).transpose(1, 2, 3, 0, 4)              # [L, 2, NH, T, D]
        keys, values = p[:, 0], p[:, 1]
    else:
        # TODO(synk): the fallback still pays an extra HBM pass for the standalone RoPE;
        # it could read mlp_out directly through a (T,1,NH,D) BlockSpec over the
        # (T, L*2, NH, D) view and write [L*NH, T, D] to also delete the XLA transpose.
        out = gist_out(h, w2, b2, cfg)
        p = out.reshape(T, L, 2, NH, D).transpose(1, 2, 3, 0, 4)
        keys, values = p[:, 0], p[:, 1]
        keys = apply_rope(keys, cos, sin, cfg)
    return keys, values


# ----------------------------------------------------------------------------
# JAX-side wrapper mirroring GistMLPWrapper
# ----------------------------------------------------------------------------
class GistMLPWrapperPallas:
    def __init__(self, num_tokens, num_layers, num_heads, head_dim,
                 include_gates=False, intermediate_size=1024,
                 dtype=jnp.bfloat16, key=None):
        self.num_tokens = num_tokens
        self.num_layers = num_layers - 1          # matches the PyTorch module
        self.num_heads = num_heads
        self.head_dim = head_dim
        self.include_gates = include_gates
        self.dtype = dtype
        hidden_dim = num_heads * head_dim
        self.hidden_dim = hidden_dim

        if key is None:
            key = jax.random.PRNGKey(0)
        k_p, k_w1, k_b1, k_w2, k_b2, k_k0, k_v0 = jax.random.split(key, 7)

        # torch.nn.init.normal_ on the gist params
        self.params = jax.random.normal(k_p, (num_tokens, hidden_dim), jnp.float32).astype(dtype)

        # Linear layers (stored as [in, out] so the kernel does x @ W + b)
        bound1 = 1.0 / math.sqrt(hidden_dim)
        self.w1 = jax.random.uniform(k_w1, (hidden_dim, intermediate_size),
                                     jnp.float32, -bound1, bound1).astype(dtype)
        self.b1 = jax.random.uniform(k_b1, (intermediate_size,),
                                     jnp.float32, -bound1, bound1).astype(dtype)
        out_dim = self.num_layers * 2 * hidden_dim
        bound2 = 1.0 / math.sqrt(intermediate_size)
        self.w2 = jax.random.uniform(k_w2, (intermediate_size, out_dim),
                                     jnp.float32, -bound2, bound2).astype(dtype)
        self.b2 = jax.random.uniform(k_b2, (out_dim,),
                                     jnp.float32, -bound2, bound2).astype(dtype)

        if self.include_gates:
            self.gates = jnp.zeros((self.num_layers, num_heads), dtype)
        else:
            self.gates = None

        # Stand-ins for the model-derived buffers (setup_layer0_kv):
        # TODO(synk): in the real module cos/sin and layer0 K/V come from the LLaMA model
        # (model.get_cos_sin on gist rope ids, embed + layer0 k/v projections).
        self.layer0_key = jax.random.normal(
            k_k0, (1, num_heads, num_tokens, head_dim), jnp.float32).astype(dtype)
        self.layer0_value = jax.random.normal(
            k_v0, (1, num_heads, num_tokens, head_dim), jnp.float32).astype(dtype)
        half = head_dim // 2
        inv_freq = 1.0 / (10000.0 ** (jnp.arange(half, dtype=jnp.float32) / half))
        pos = jnp.arange(num_tokens, dtype=jnp.float32)
        angles = pos[:, None] * inv_freq[None, :]              # [T, D/2]
        angles = jnp.concatenate([angles, angles], axis=-1)    # [T, D]
        self.cos = jnp.cos(angles)                             # f32 tables kept in f32
        self.sin = jnp.sin(angles)

    def __call__(self, batch_size):
        B = batch_size
        NH, T, D, L = self.num_heads, self.num_tokens, self.head_dim, self.num_layers

        prefixes = [{
            "key": jnp.broadcast_to(self.layer0_key, (B, NH, T, D)),
            "value": jnp.broadcast_to(self.layer0_value, (B, NH, T, D)),
        }]

        # Pallas pipeline: hidden GEMM (1 step) + W2-streaming GEMM with fused RoPE.
        keys, values = gist_prefix_kv(self.params, self.w1, self.b1, self.w2, self.b2,
                                      self.cos, self.sin, L, NH, D)  # [L, NH, T, D] each

        for layer_i in range(L):
            layer_prefix = {
                "key": jnp.broadcast_to(keys[layer_i][None], (B, NH, T, D)),
                "value": jnp.broadcast_to(values[layer_i][None], (B, NH, T, D)),
            }
            if self.include_gates:
                layer_prefix["gate"] = self.gates[layer_i]
            prefixes.append(layer_prefix)

        assert len(prefixes) == L + 1
        return prefixes


if __name__ == "__main__":
    # Small shapes consistent with the module (lane-dense head_dim; out_dim = 4*2*512 = 4096).
    num_tokens = 8
    num_layers = 5          # module predicts num_layers - 1 = 4 layers
    num_heads = 4
    head_dim = 128          # hidden_dim = 512
    intermediate_size = 256
    batch_size = 2

    module = GistMLPWrapperPallas(
        num_tokens=num_tokens,
        num_layers=num_layers,
        num_heads=num_heads,
        head_dim=head_dim,
        include_gates=True,
        intermediate_size=intermediate_size,
        dtype=jnp.bfloat16,
        key=jax.random.PRNGKey(0),
    )

    prefixes = module(batch_size)
    for leaf in jax.tree_util.tree_leaves(prefixes):
        jax.block_until_ready(leaf)

    # ---------------- pure-JAX reference check ----------------
    f32 = jnp.float32
    hp = jax.lax.Precision.HIGHEST
    L = module.num_layers
    h_ref = jnp.tanh(jnp.dot(module.params.astype(f32), module.w1.astype(f32), precision=hp)
                     + module.b1.astype(f32)).astype(module.dtype)
    out_ref = (jnp.dot(h_ref.astype(f32), module.w2.astype(f32), precision=hp)
               + module.b2.astype(f32)).astype(module.dtype)
    pr = out_ref.astype(f32).reshape(num_tokens, L, 2, num_heads, head_dim).transpose(1, 2, 3, 0, 4)
    ref_keys, ref_values = pr[:, 0], pr[:, 1]
    rot = jnp.concatenate([-ref_keys[..., head_dim // 2:], ref_keys[..., :head_dim // 2]], axis=-1)
    ref_keys = ref_keys * module.cos + rot * module.sin

    for li in range(L):
        got_k = prefixes[li + 1]["key"][0].astype(f32)
        got_v = prefixes[li + 1]["value"][0].astype(f32)
        assert jnp.allclose(got_k, ref_keys[li], atol=5e-2, rtol=5e-2), f"key mismatch @ layer {li}"
        assert jnp.allclose(got_v, ref_values[li], atol=5e-2, rtol=5e-2), f"value mismatch @ layer {li}"

    # Sanity checks on shapes / dtypes.
    assert len(prefixes) == num_layers   # (num_layers - 1) predicted layers + layer0
    for pfx in prefixes:
        assert pfx["key"].shape == (batch_size, num_heads, num_tokens, head_dim)
        assert pfx["value"].shape == (batch_size, num_heads, num_tokens, head_dim)
        assert pfx["key"].dtype == jnp.bfloat16

    print("KERNEL_OK")
</pallas_src>

<mosaic_0001>
module attributes {stable_mosaic.version = 11 : i64} {
  func.func @_gist_hidden_kernel(%arg0: i32, %arg1: memref<8x512xbf16, #tpu.memory_space<vmem>>, %arg2: memref<512x256xbf16, #tpu.memory_space<vmem>>, %arg3: memref<1x256xbf16, #tpu.memory_space<vmem>>, %arg4: memref<8x256xbf16, #tpu.memory_space<vmem>>) attributes {dimension_semantics = [#tpu.dimension_semantics<parallel>], iteration_bounds = array<i64: 1>, scalar_prefetch = 0 : i64, scratch_operands = 0 : i64, tpu.core_type = #tpu.core_type<tc>, window_params = [{pipeline_mode = #tpu.pipeline_mode<synchronous>, transform_indices = @transform_0, window_bounds = array<i64: 8, 512>}, {transform_indices = @transform_1, window_bounds = array<i64: 512, 256>}, {transform_indices = @transform_2, window_bounds = array<i64: 1, 256>}, {transform_indices = @transform_3, window_bounds = array<i64: 8, 256>}]} {
    %c0 = arith.constant 0 : index
    %c0_0 = arith.constant 0 : index
    %0 = vector.load %arg1[%c0, %c0_0] : memref<8x512xbf16, #tpu.memory_space<vmem>>, vector<8x512xbf16>
    %c0_1 = arith.constant 0 : index
    %c0_2 = arith.constant 0 : index
    %1 = vector.load %arg2[%c0_1, %c0_2] : memref<512x256xbf16, #tpu.memory_space<vmem>>, vector<512x256xbf16>
    %cst = arith.constant dense<0.000000e+00> : vector<8x256xf32>
    %2 = tpu.matmul %0, %1, %cst {dimension_numbers = #tpu.dot_dimension_numbers<[1], [0], [0], [1], [0, 0, 1, 1], [], []>} : vector<8x512xbf16>, vector<512x256xbf16>, vector<8x256xf32> -> vector<8x256xf32>
    %c0_3 = arith.constant 0 : index
    %c0_4 = arith.constant 0 : index
    %3 = vector.load %arg3[%c0_3, %c0_4] : memref<1x256xbf16, #tpu.memory_space<vmem>>, vector<1x256xbf16>
    %4 = arith.extf %3 : vector<1x256xbf16> to vector<1x256xf32>
    %5 = vector.broadcast %4 : vector<1x256xf32> to vector<8x256xf32>
    %6 = arith.addf %2, %5 : vector<8x256xf32>
    %7 = math.tanh %6 : vector<8x256xf32>
    %8 = arith.truncf %7 : vector<8x256xf32> to vector<8x256xbf16>
    %c0_5 = arith.constant 0 : index
    %c0_6 = arith.constant 0 : index
    %9 = vector.load %arg4[%c0_5, %c0_6] : memref<8x256xbf16, #tpu.memory_space<vmem>>, vector<8x256xbf16>
    tpu.vector_store %arg4[%c0_5, %c0_6], %8 {strides = array<i32>} : memref<8x256xbf16, #tpu.memory_space<vmem>>, vector<8x256xbf16>,
    return
  }
  func.func @transform_0(%arg0: i32) -> (i32, i32) {
    %c0_i32 = arith.constant 0 : i32
    %c0_i32_0 = arith.constant 0 : i32
    %c0_i32_1 = arith.constant 0 : i32
    return %c0_i32, %c0_i32_0 : i32, i32
  }
  func.func @transform_1(%arg0: i32) -> (i32, i32) {
    %c0_i32 = arith.constant 0 : i32
    %c0_i32_0 = arith.constant 0 : i32
    return %c0_i32, %arg0 : i32, i32
  }
  func.func @transform_2(%arg0: i32) -> (i32, i32) {
    %c0_i32 = arith.constant 0 : i32
    %c0_i32_0 = arith.constant 0 : i32
    return %c0_i32, %arg0 : i32, i32
  }
  func.func @transform_3(%arg0: i32) -> (i32, i32) {
    %c0_i32 = arith.constant 0 : i32
    %c0_i32_0 = arith.constant 0 : i32
    return %c0_i32, %arg0 : i32, i32
  }
}

</mosaic_0001>

<llo_original>
// kernel: tpu_custom_call.1
$region0: #{tpu_custom_call.1}
  #allocation0 [shape = 'u32[]', space=smem, size = 0x4, offset = 0x4, fixed_abs, tag = 'smem constant byte address 0x4 - core index']
  #allocation1 [shape = 'u32[144,128]{1,0:T(1,128)}', space=vmem, size = 0x12000, scoped, tag = 'internal scratch']
  %s0 = inlined_call_operand.hbm [shape: bf16[8,512], index: 0, kind: input, shape index: {}]
  %s1 = inlined_call_operand.hbm [shape: bf16[512,256], index: 1, kind: input, shape index: {}]
  %s2 = inlined_call_operand.vmem [shape: bf16[1,256], index: 2, kind: input, shape index: {}]
  %s3 = inlined_call_operand.hbm [shape: bf16[8,256], index: 3, kind: output, shape index: {}]
  %s4 = sld [smem:[#allocation0]]
  $region30: #{tpu_custom_call.1} parent=0
    _
  %s6 = ssub.s32 1, %s4
  %s7 = scalar_select 0, %s6, %s4
  $region1: #{tpu_custom_call.1} parent=0
    #allocation2 [shape = 'u8[8192]{0}', space=vmem, size = 0x2000, scoped, tag = 'input window, operand 0, single buffered']
    #allocation3 [shape = 's32[1]{0}', space=sflag, size = 0x4, scoped, tag = 'scoped memory for tpu_custom_call.1']
    #allocation4 [shape = 's32[1]{0}', space=sflag, size = 0x4, scoped, tag = 'scoped memory for tpu_custom_call.1']
    #allocation5 [shape = 'u8[262144]{0}', space=vmem, size = 0x40000, scoped, tag = 'input window, operand 1, single buffered']
    #allocation6 [shape = 's32[1]{0}', space=sflag, size = 0x4, scoped, tag = 'scoped memory for tpu_custom_call.1']
    #allocation7 [shape = 'u8[4096]{0}', space=vmem, size = 0x1000, scoped, tag = 'output window, operand 0, single buffered']
    %8 = vsyncpa [#allocation3], 0
    %9 = vsyncpa [#allocation6], 0
    %10 = vsyncpa [#allocation4], 0
    // Predicated region
    $region2: #{tpu_custom_call.1} parent=1 // pred_check
      _
    $region3: #{tpu_custom_call.1} parent=1 // pred_check_branch
      %12 = sbr.rel (0) target = $region5
    $region4: #{tpu_custom_call.1} parent=1 // pred_region
      %s14 = ssub.s32 256, 256
      %15 = vsyncadd [#allocation3], %s14
      %s17 = sshll.u32 [#allocation2], 4
      %s18 = int_to_ptr.vmem [resolvable:$true] %s17
      %20 = dma.hbm_to_vmem [thread:$0]  %s0, 256, %s18, [#allocation3]
    $region5: #{tpu_custom_call.1} parent=1 // pred_fallthru
      _
    // Predicated region
    $region6: #{tpu_custom_call.1} parent=1 // pred_check
      _
    $region7: #{tpu_custom_call.1} parent=1 // pred_check_branch
      %22 = sbr.rel (0) target = $region9
    $region8: #{tpu_custom_call.1} parent=1 // pred_region
      %s24 = ssub.s32 8192, 8192
      %25 = vsyncadd [#allocation6], %s24
      %s26 = sshll.u32 [#allocation5], 4
      %s27 = int_to_ptr.vmem [resolvable:$true] %s26
      %32 = dma.hbm_to_vmem [thread:$0]  %s1, 8192, %s27, [#allocation6], 128, 128, 8
    $region9: #{tpu_custom_call.1} parent=1 // pred_fallthru
      _
    // Predicated region
    $region10: #{tpu_custom_call.1} parent=1 // pred_check
      _
    $region11: #{tpu_custom_call.1} parent=1 // pred_check_branch
      %34 = sbr.rel (0) target = $region13
    $region12: #{tpu_custom_call.1} parent=1 // pred_region
      _
    $region13: #{tpu_custom_call.1} parent=1 // pred_fallthru
      _
    // Predicated region
    $region14: #{tpu_custom_call.1} parent=1 // pred_check
      _
    $region15: #{tpu_custom_call.1} parent=1 // pred_check_branch
      %36 = sbr.rel (0) target = $region17
    $region16: #{tpu_custom_call.1} parent=1 // pred_region
      %37 = dma.done [#allocation3], 256
    $region17: #{tpu_custom_call.1} parent=1 // pred_fallthru
      _
    // Predicated region
    $region18: #{tpu_custom_call.1} parent=1 // pred_check
      _
    $region19: #{tpu_custom_call.1} parent=1 // pred_check_branch
      %39 = sbr.rel (0) target = $region21
    $region20: #{tpu_custom_call.1} parent=1 // pred_region
      %40 = dma.done [#allocation6], 8192
    $region21: #{tpu_custom_call.1} parent=1 // pred_fallthru
      _
    %v41 = vld [vmem:[#allocation2] sm:$0xff]
    %v42 = vld [vmem:[#allocation2 + $0x8] sm:$0xff]
    %v43 = vld [vmem:[#allocation5] sm:$0xff]
    %v44 = vld [vmem:[#allocation5 + $0x8] sm:$0xff]
    %v45 = vld [vmem:[#allocation5 + $0x10] sm:$0xff]
    %v46 = vld [vmem:[#allocation5 + $0x18] sm:$0xff]
    %v47 = vld [vmem:[#allocation5 + $0x20] sm:$0xff]
    %v48 = vld [vmem:[#allocation5 + $0x28] sm:$0xff]
    %v49 = vld [vmem:[#allocation5 + $0x30] sm:$0xff]
    %v50 = vld [vmem:[#allocation5 + $0x38] sm:$0xff]
    %v51 = vld [vmem:[#allocation5 + $0x40] sm:$0xff]
    %v52 = vld [vmem:[#allocation5 + $0x48] sm:$0xff]
    %v53 = vld [vmem:[#allocation5 + $0x50] sm:$0xff]
    %v54 = vld [vmem:[#allocation5 + $0x58] sm:$0xff]
    %v55 = vld [vmem:[#allocation5 + $0x60] sm:$0xff]
    %v56 = vld [vmem:[#allocation5 + $0x68] sm:$0xff]
    %v57 = vld [vmem:[#allocation5 + $0x70] sm:$0xff]
    %v58 = vld [vmem:[#allocation5 + $0x78] sm:$0xff]
    %v59 = vld [vmem:[#allocation5 + $0x80] sm:$0xff]
    %v60 = vld [vmem:[#allocation5 + $0x88] sm:$0xff]
    %v61 = vld [vmem:[#allocation5 + $0x90] sm:$0xff]
    %v62 = vld [vmem:[#allocation5 + $0x98] sm:$0xff]
    %v63 = vld [vmem:[#allocation5 + $0xa0] sm:$0xff]
    %v64 = vld [vmem:[#allocation5 + $0xa8] sm:$0xff]
    %v65 = vld [vmem:[#allocation5 + $0xb0] sm:$0xff]
    %v66 = vld [vmem:[#allocation5 + $0xb8] sm:$0xff]
    %v67 = vld [vmem:[#allocation5 + $0xc0] sm:$0xff]
    %v68 = vld [vmem:[#allocation5 + $0xc8] sm:$0xff]
    %v69 = vld [vmem:[#allocation5 + $0xd0] sm:$0xff]
    %v70 = vld [vmem:[#allocation5 + $0xd8] sm:$0xff]
    %v71 = vld [vmem:[#allocation5 + $0xe0] sm:$0xff]
    %v72 = vld [vmem:[#allocation5 + $0xe8] sm:$0xff]
    %v73 = vld [vmem:[#allocation5 + $0xf0] sm:$0xff]
    %v74 = vld [vmem:[#allocation5 + $0xf8] sm:$0xff]
    %v75 = vld [vmem:[#allocation5 + $0x100] sm:$0xff]
    %v76 = vld [vmem:[#allocation5 + $0x108] sm:$0xff]
    %v77 = vld [vmem:[#allocation5 + $0x110] sm:$0xff]
    %v78 = vld [vmem:[#allocation5 + $0x118] sm:$0xff]
    %v79 = vld [vmem:[#allocation5 + $0x120] sm:$0xff]
    %v80 = vld [vmem:[#allocation5 + $0x128] sm:$0xff]
    %v81 = vld [vmem:[#allocation5 + $0x130] sm:$0xff]
    %v82 = vld [vmem:[#allocation5 + $0x138] sm:$0xff]
    %v83 = vld [vmem:[#allocation5 + $0x140] sm:$0xff]
    %v84 = vld [vmem:[#allocation5 + $0x148] sm:$0xff]
    %v85 = vld [vmem:[#allocation5 + $0x150] sm:$0xff]
    %v86 = vld [vmem:[#allocation5 + $0x158] sm:$0xff]
    %v87 = vld [vmem:[#allocation5 + $0x160] sm:$0xff]
    %v88 = vld [vmem:[#allocation5 + $0x168] sm:$0xff]
    %v89 = vld [vmem:[#allocation5 + $0x170] sm:$0xff]
    %v90 = vld [vmem:[#allocation5 + $0x178] sm:$0xff]
    %v91 = vld [vmem:[#allocation5 + $0x180] sm:$0xff]
    %v92 = vld [vmem:[#allocation5 + $0x188] sm:$0xff]
    %v93 = vld [vmem:[#allocation5 + $0x190] sm:$0xff]
    %v94 = vld [vmem:[#allocation5 + $0x198] sm:$0xff]
    %v95 = vld [vmem:[#allocation5 + $0x1a0] sm:$0xff]
    %v96 = vld [vmem:[#allocation5 + $0x1a8] sm:$0xff]
    %v97 = vld [vmem:[#allocation5 + $0x1b0] sm:$0xff]
    %v98 = vld [vmem:[#allocation5 + $0x1b8] sm:$0xff]
    %v99 = vld [vmem:[#allocation5 + $0x1c0] sm:$0xff]
    %v100 = vld [vmem:[#allocation5 + $0x1c8] sm:$0xff]
    %v101 = vld [vmem:[#allocation5 + $0x1d0] sm:$0xff]
    %v102 = vld [vmem:[#allocation5 + $0x1d8] sm:$0xff]
    %v103 = vld [vmem:[#allocation5 + $0x1e0] sm:$0xff]
    %v104 = vld [vmem:[#allocation5 + $0x1e8] sm:$0xff]
    %v105 = vld [vmem:[#allocation5 + $0x1f0] sm:$0xff]
    %v106 = vld [vmem:[#allocation5 + $0x1f8] sm:$0xff]
    %v107 = vld [vmem:[%s2] sm:$0x3]
    %v108 = vunpack.c.l.bf16 %v107
    %v110 = vlaneseq
    %v111 = vshrl.u32 %v110, 7
    %v112 = vsub.s32 0, %v111
    %v113 = vrot.slane %v108, %v112
    %v114 = vlaneseq
    %v115 = vshrl.u32 %v114, 7
    %v116 = vsub.s32 2, %v115
    %v117 = vrot.slane %v108, %v116
    %v120 = vlaneseq
    %v121 = vshrl.u32 %v120, 7
    %v122 = vsub.s32 0, %v121
    %v123 = vrot.slane %v113, %v122
    %v124 = vlaneseq
    %v125 = vshrl.u32 %v124, 7
    %v126 = vsub.s32 0, %v125
    %v127 = vrot.slane %v117, %v126
    %v130 = vunpack.c.l.b16 %v41
    %v131 = vunpack.c.h.b16 %v41
    %v132 = vunpack.c.l.b16 %v42
    %v133 = vunpack.c.h.b16 %v42
    %v134 = vpack.c.b16 %v130, %v130
    %v135 = vpack.c.b16 %v131, %v131
    %v136 = vpack.c.b16 %v132, %v132
    %v137 = vpack.c.b16 %v133, %v133
    %v206 = vunpack.c.l.b16 %v43
    %v207 = vunpack.c.h.b16 %v43
    %v208 = vunpack.c.l.b16 %v44
    %v209 = vunpack.c.h.b16 %v44
    %v210 = vunpack.c.l.b16 %v45
    %v211 = vunpack.c.h.b16 %v45
    %v212 = vunpack.c.l.b16 %v46
    %v213 = vunpack.c.h.b16 %v46
    %v214 = vunpack.c.l.b16 %v47
    %v215 = vunpack.c.h.b16 %v47
    %v216 = vunpack.c.l.b16 %v48
    %v217 = vunpack.c.h.b16 %v48
    %v218 = vunpack.c.l.b16 %v49
    %v219 = vunpack.c.h.b16 %v49
    %v220 = vunpack.c.l.b16 %v50
    %v221 = vunpack.c.h.b16 %v50
    %v222 = vunpack.c.l.b16 %v51
    %v223 = vunpack.c.h.b16 %v51
    %v224 = vunpack.c.l.b16 %v52
    %v225 = vunpack.c.h.b16 %v52
    %v226 = vunpack.c.l.b16 %v53
    %v227 = vunpack.c.h.b16 %v53
    %v228 = vunpack.c.l.b16 %v54
    %v229 = vunpack.c.h.b16 %v54
    %v230 = vunpack.c.l.b16 %v55
    %v231 = vunpack.c.h.b16 %v55
    %v232 = vunpack.c.l.b16 %v56
    %v233 = vunpack.c.h.b16 %v56
    %v234 = vunpack.c.l.b16 %v57
    %v235 = vunpack.c.h.b16 %v57
    %v236 = vunpack.c.l.b16 %v58
    %v237 = vunpack.c.h.b16 %v58
    %v238 = vunpack.c.l.b16 %v59
    %v239 = vunpack.c.h.b16 %v59
    %v240 = vunpack.c.l.b16 %v60
    %v241 = vunpack.c.h.b16 %v60
    %v242 = vunpack.c.l.b16 %v61
    %v243 = vunpack.c.h.b16 %v61
    %v244 = vunpack.c.l.b16 %v62
    %v245 = vunpack.c.h.b16 %v62
    %v246 = vunpack.c.l.b16 %v63
    %v247 = vunpack.c.h.b16 %v63
    %v248 = vunpack.c.l.b16 %v64
    %v249 = vunpack.c.h.b16 %v64
    %v250 = vunpack.c.l.b16 %v65
    %v251 = vunpack.c.h.b16 %v65
    %v252 = vunpack.c.l.b16 %v66
    %v253 = vunpack.c.h.b16 %v66
    %v254 = vunpack.c.l.b16 %v67
    %v255 = vunpack.c.h.b16 %v67
    %v256 = vunpack.c.l.b16 %v68
    %v257 = vunpack.c.h.b16 %v68
    %v258 = vunpack.c.l.b16 %v69
    %v259 = vunpack.c.h.b16 %v69
    %v260 = vunpack.c.l.b16 %v70
    %v261 = vunpack.c.h.b16 %v70
    %v262 = vunpack.c.l.b16 %v71
    %v263 = vunpack.c.h.b16 %v71
    %v264 = vunpack.c.l.b16 %v72
    %v265 = vunpack.c.h.b16 %v72
    %v266 = vunpack.c.l.b16 %v73
    %v267 = vunpack.c.h.b16 %v73
    %v268 = vunpack.c.l.b16 %v74
    %v269 = vunpack.c.h.b16 %v74
    %v270 = vunpack.c.l.b16 %v75
    %v271 = vunpack.c.h.b16 %v75
    %v272 = vunpack.c.l.b16 %v76
    %v273 = vunpack.c.h.b16 %v76
    %v274 = vunpack.c.l.b16 %v77
    %v275 = vunpack.c.h.b16 %v77
    %v276 = vunpack.c.l.b16 %v78
    %v277 = vunpack.c.h.b16 %v78
    %v278 = vunpack.c.l.b16 %v79
    %v279 = vunpack.c.h.b16 %v79
    %v280 = vunpack.c.l.b16 %v80
    %v281 = vunpack.c.h.b16 %v80
    %v282 = vunpack.c.l.b16 %v81
    %v283 = vunpack.c.h.b16 %v81
    %v284 = vunpack.c.l.b16 %v82
    %v285 = vunpack.c.h.b16 %v82
    %v286 = vunpack.c.l.b16 %v83
    %v287 = vunpack.c.h.b16 %v83
    %v288 = vunpack.c.l.b16 %v84
    %v289 = vunpack.c.h.b16 %v84
    %v290 = vunpack.c.l.b16 %v85
    %v291 = vunpack.c.h.b16 %v85
    %v292 = vunpack.c.l.b16 %v86
    %v293 = vunpack.c.h.b16 %v86
    %v294 = vunpack.c.l.b16 %v87
    %v295 = vunpack.c.h.b16 %v87
    %v296 = vunpack.c.l.b16 %v88
    %v297 = vunpack.c.h.b16 %v88
    %v298 = vunpack.c.l.b16 %v89
    %v299 = vunpack.c.h.b16 %v89
    %v300 = vunpack.c.l.b16 %v90
    %v301 = vunpack.c.h.b16 %v90
    %v302 = vunpack.c.l.b16 %v91
    %v303 = vunpack.c.h.b16 %v91
    %v304 = vunpack.c.l.b16 %v92
    %v305 = vunpack.c.h.b16 %v92
    %v306 = vunpack.c.l.b16 %v93
    %v307 = vunpack.c.h.b16 %v93
    %v308 = vunpack.c.l.b16 %v94
    %v309 = vunpack.c.h.b16 %v94
    %v310 = vunpack.c.l.b16 %v95
    %v311 = vunpack.c.h.b16 %v95
    %v312 = vunpack.c.l.b16 %v96
    %v313 = vunpack.c.h.b16 %v96
    %v314 = vunpack.c.l.b16 %v97
    %v315 = vunpack.c.h.b16 %v97
    %v316 = vunpack.c.l.b16 %v98
    %v317 = vunpack.c.h.b16 %v98
    %v318 = vunpack.c.l.b16 %v99
    %v319 = vunpack.c.h.b16 %v99
    %v320 = vunpack.c.l.b16 %v100
    %v321 = vunpack.c.h.b16 %v100
    %v322 = vunpack.c.l.b16 %v101
    %v323 = vunpack.c.h.b16 %v101
    %v324 = vunpack.c.l.b16 %v102
    %v325 = vunpack.c.h.b16 %v102
    %v326 = vunpack.c.l.b16 %v103
    %v327 = vunpack.c.h.b16 %v103
    %v328 = vunpack.c.l.b16 %v104
    %v329 = vunpack.c.h.b16 %v104
    %v330 = vunpack.c.l.b16 %v105
    %v331 = vunpack.c.h.b16 %v105
    %v332 = vunpack.c.l.b16 %v106
    %v333 = vunpack.c.h.b16 %v106
    %v334 = vpack.c.b16 %v208, %v206
    %v335 = vpack.c.b16 %v209, %v207
    %v336 = vpack.c.b16 %v212, %v210
    %v337 = vpack.c.b16 %v213, %v211
    %v338 = vpack.c.b16 %v216, %v214
    %v339 = vpack.c.b16 %v217, %v215
    %v340 = vpack.c.b16 %v220, %v218
    %v341 = vpack.c.b16 %v221, %v219
    %v342 = vpack.c.b16 %v224, %v222
    %v343 = vpack.c.b16 %v225, %v223
    %v344 = vpack.c.b16 %v228, %v226
    %v345 = vpack.c.b16 %v229, %v227
    %v346 = vpack.c.b16 %v232, %v230
    %v347 = vpack.c.b16 %v233, %v231
    %v348 = vpack.c.b16 %v236, %v234
    %v349 = vpack.c.b16 %v237, %v235
    %v350 = vpack.c.b16 %v240, %v238
    %v351 = vpack.c.b16 %v241, %v239
    %v352 = vpack.c.b16 %v244, %v242
    %v353 = vpack.c.b16 %v245, %v243
    %v354 = vpack.c.b16 %v248, %v246
    %v355 = vpack.c.b16 %v249, %v247
    %v356 = vpack.c.b16 %v252, %v250
    %v357 = vpack.c.b16 %v253, %v251
    %v358 = vpack.c.b16 %v256, %v254
    %v359 = vpack.c.b16 %v257, %v255
    %v360 = vpack.c.b16 %v260, %v258
    %v361 = vpack.c.b16 %v261, %v259
    %v362 = vpack.c.b16 %v264, %v262
    %v363 = vpack.c.b16 %v265, %v263
    %v364 = vpack.c.b16 %v268, %v266
    %v365 = vpack.c.b16 %v269, %v267
    %v366 = vpack.c.b16 %v272, %v270
    %v367 = vpack.c.b16 %v273, %v271
    %v368 = vpack.c.b16 %v276, %v274
    %v369 = vpack.c.b16 %v277, %v275
    %v370 = vpack.c.b16 %v280, %v278
    %v371 = vpack.c.b16 %v281, %v279
    %v372 = vpack.c.b16 %v284, %v282
    %v373 = vpack.c.b16 %v285, %v283
    %v374 = vpack.c.b16 %v288, %v286
    %v375 = vpack.c.b16 %v289, %v287
    %v376 = vpack.c.b16 %v292, %v290
    %v377 = vpack.c.b16 %v293, %v291
    %v378 = vpack.c.b16 %v296, %v294
    %v379 = vpack.c.b16 %v297, %v295
    %v380 = vpack.c.b16 %v300, %v298
    %v381 = vpack.c.b16 %v301, %v299
    %v382 = vpack.c.b16 %v304, %v302
    %v383 = vpack.c.b16 %v305, %v303
    %v384 = vpack.c.b16 %v308, %v306
    %v385 = vpack.c.b16 %v309, %v307
    %v386 = vpack.c.b16 %v312, %v310
    %v387 = vpack.c.b16 %v313, %v311
    %v388 = vpack.c.b16 %v316, %v314
    %v389 = vpack.c.b16 %v317, %v315
    %v390 = vpack.c.b16 %v320, %v318
    %v391 = vpack.c.b16 %v321, %v319
    %v392 = vpack.c.b16 %v324, %v322
    %v393 = vpack.c.b16 %v325, %v323
    %v394 = vpack.c.b16 %v328, %v326
    %v395 = vpack.c.b16 %v329, %v327
    %v396 = vpack.c.b16 %v332, %v330
    %v397 = vpack.c.b16 %v333, %v331
    %462 = vmatprep.subr.bf16.mxu0 %v349
    %463 = vmatpush1.bf16.msra.mxu0 %v348
    %464 = vmatprep.subr.bf16.mxu0 %v347
    %465 = vmatpush1.bf16.msra.mxu0 %v346
    %466 = vmatprep.subr.bf16.mxu0 %v345
    %467 = vmatpush1.bf16.msra.mxu0 %v344
    %468 = vmatprep.subr.bf16.mxu0 %v343
    %469 = vmatpush1.bf16.msra.mxu0 %v342
    %470 = vmatprep.subr.bf16.mxu0 %v341
    %471 = vmatpush1.bf16.msra.mxu0 %v340
    %472 = vmatprep.subr.bf16.mxu0 %v339
    %473 = vmatpush1.bf16.msra.mxu0 %v338
    %474 = vmatprep.subr.bf16.mxu0 %v337
    %475 = vmatpush1.bf16.msra.mxu0 %v336
    %476 = vmatprep.subr.bf16.mxu0 %v335
    %477 = vmatpush1.bf16.msra.mxu0 %v334
    %478 = vmatprep.subr.bf16.mxu0 %v365
    %479 = vmatpush2.bf16.msra.mxu0 %v364
    %480 = vmatprep.subr.bf16.mxu0 %v363
    %481 = vmatpush2.bf16.msra.mxu0 %v362
    %482 = vmatprep.subr.bf16.mxu0 %v361
    %483 = vmatpush2.bf16.msra.mxu0 %v360
    %484 = vmatprep.subr.bf16.mxu0 %v359
    %485 = vmatpush2.bf16.msra.mxu0 %v358
    %486 = vmatprep.subr.bf16.mxu0 %v357
    %487 = vmatpush2.bf16.msra.mxu0 %v356
    %488 = vmatprep.subr.bf16.mxu0 %v355
    %489 = vmatpush2.bf16.msra.mxu0 %v354
    %490 = vmatprep.subr.bf16.mxu0 %v353
    %491 = vmatpush2.bf16.msra.mxu0 %v352
    %492 = vmatprep.subr.bf16.mxu0 %v351
    %493 = vmatpush2.bf16.msra.mxu0 %v350
    %494 = vmatprep.mubr.bf16.mxu0 %v135
    %495 = vmatmul.mubr.bf16.gmra.mxu0 %v134
    %v496 = vpop.f32.mrf.mxu0
    %v497 = vadd.f32 %v123, %v496
    %v498 = vpop.f32.mrf.mxu0
    %v499 = vadd.f32 %v127, %v498
    %v500 = vpop.f32.mrf.mxu0
    %v501 = vpop.f32.mrf.mxu0
    %502 = vdwg.mxu0
    %503 = vmatprep.subr.bf16.mxu0 %v381
    %504 = vmatpush1.bf16.msra.mxu0 %v380
    %505 = vmatprep.subr.bf16.mxu0 %v379
    %506 = vmatpush1.bf16.msra.mxu0 %v378
    %507 = vmatprep.subr.bf16.mxu0 %v377
    %508 = vmatpush1.bf16.msra.mxu0 %v376
    %509 = vmatprep.subr.bf16.mxu0 %v375
    %510 = vmatpush1.bf16.msra.mxu0 %v374
    %511 = vmatprep.subr.bf16.mxu0 %v373
    %512 = vmatpush1.bf16.msra.mxu0 %v372
    %513 = vmatprep.subr.bf16.mxu0 %v371
    %514 = vmatpush1.bf16.msra.mxu0 %v370
    %515 = vmatprep.subr.bf16.mxu0 %v369
    %516 = vmatpush1.bf16.msra.mxu0 %v368
    %517 = vmatprep.subr.bf16.mxu0 %v367
    %518 = vmatpush1.bf16.msra.mxu0 %v366
    %519 = vmatprep.subr.bf16.mxu0 %v397
    %520 = vmatpush2.bf16.msra.mxu0 %v396
    %521 = vmatprep.subr.bf16.mxu0 %v395
    %522 = vmatpush2.bf16.msra.mxu0 %v394
    %523 = vmatprep.subr.bf16.mxu0 %v393
    %524 = vmatpush2.bf16.msra.mxu0 %v392
    %525 = vmatprep.subr.bf16.mxu0 %v391
    %526 = vmatpush2.bf16.msra.mxu0 %v390
    %527 = vmatprep.subr.bf16.mxu0 %v389
    %528 = vmatpush2.bf16.msra.mxu0 %v388
    %529 = vmatprep.subr.bf16.mxu0 %v387
    %530 = vmatpush2.bf16.msra.mxu0 %v386
    %531 = vmatprep.subr.bf16.mxu0 %v385
    %532 = vmatpush2.bf16.msra.mxu0 %v384
    %533 = vmatprep.subr.bf16.mxu0 %v383
    %534 = vmatpush2.bf16.msra.mxu0 %v382
    %535 = vmatprep.mubr.bf16.mxu0 %v137
    %536 = vmatmul.mubr.bf16.gmra.mxu0 %v136
    %v537 = vpop.f32.mrf.mxu0
    %v538 = vadd.f32 %v497, %v537
    %v539 = vpop.f32.mrf.mxu0
    %v540 = vadd.f32 %v499, %v539
    %v541 = vpop.f32.mrf.mxu0
    %v542 = vpop.f32.mrf.mxu0
    %543 = vdwg.mxu0
    %v544 = vtanh.pop %v538
    %v545 = vtanh.pop %v540
    %v546 = vpack.c.bf16 %v544, %v544
    %v547 = vpack.c.bf16 %v545, %v545
    %v550 = vunpack.c.l.b16 %v546
    %v551 = vunpack.c.l.b16 %v547
    %v552 = vpack.c.b16 %v551, %v550
    %554 = vst [vmem:[#allocation7] sm:$0xff] %v552
    // Predicated region
    $region22: #{tpu_custom_call.1} parent=1 // pred_check
      _
    $region23: #{tpu_custom_call.1} parent=1 // pred_check_branch
      %556 = sbr.rel (0) target = $region25
    $region24: #{tpu_custom_call.1} parent=1 // pred_region
      %s558 = ssub.s32 128, 128
      %559 = vsyncadd [#allocation4], %s558
      %s561 = sshll.u32 [#allocation7], 4
      %s562 = int_to_ptr.vmem [resolvable:$true] %s561
      %564 = dma.vmem_to_hbm [thread:$0]  %s562, 128, %s3, [#allocation4]
    $region25: #{tpu_custom_call.1} parent=1 // pred_fallthru
      _
    // Predicated region
    $region26: #{tpu_custom_call.1} parent=1 // pred_check
      _
    $region27: #{tpu_custom_call.1} parent=1 // pred_check_branch
      %566 = sbr.rel (0) target = $region29
    $region28: #{tpu_custom_call.1} parent=1 // pred_region
      %567 = dma.done [#allocation4], 128
    $region29: #{tpu_custom_call.1} parent=1 // pred_fallthru
      _
    %568 = vsyncpa [#allocation3], 1
    %569 = vsyncpa [#allocation6], 1
    %570 = vsyncpa [#allocation4], 1

</llo_original>
